<compile_context>
chip_gen: v7x
topology: tpu7x:2x2x1
jax: 0.10.0
libtpu: 0.0.40
codegen_flags: <defaults>
</compile_context>

<pallas_src>
import jax
import jax.numpy as jnp
from jax import lax
from jax.experimental import pallas as pl
from jax.experimental.pallas import tpu as pltpu

_MiB = 1024 * 1024


# --------------------------------------------------------------------------- #
# Helpers
# --------------------------------------------------------------------------- #
def _block_spec(block_shape, index_map, buffer_count=None):
    """BlockSpec with an optional pipeline buffer-count override.

    Falls back to a plain (double-buffered) BlockSpec if this jax build does
    not accept the pipeline_mode kwarg, so the script always runs.
    """
    if buffer_count is not None and hasattr(pl, "Buffered"):
        try:
            return pl.BlockSpec(block_shape, index_map,
                                pipeline_mode=pl.Buffered(buffer_count))
        except TypeError:
            pass
    return pl.BlockSpec(block_shape, index_map)


def _device_vmem_bytes():
    try:
        return int(pltpu.get_tpu_info().vmem_capacity_bytes)
    except Exception:
        return 64 * _MiB  # conservative: v7x per-TensorCore VMEM


def _vmem_limit(needed_bytes):
    cap = _device_vmem_bytes()
    ceiling = max(cap - 8 * _MiB, 32 * _MiB)  # headroom for internal scratch
    return int(min(max(int(needed_bytes), 32 * _MiB), ceiling))


# --------------------------------------------------------------------------- #
# Kernels
# --------------------------------------------------------------------------- #
def _make_fused_kernel(h_chunk):
    """Large-M kernel: h scratch reused across the j (w2-column) grid axis."""

    def kernel(x_ref, w1_ref, b1_ref, w2_ref, b2_ref, o_ref, h_ref):
        # x_ref:  (tile_m, in_dim)   input dtype (cast in-kernel)
        # w1_ref: (in_dim, hidden)   bf16 (K-major)
        # b1_ref: (1, hidden)        f32
        # w2_ref: (hidden, tile_n)   bf16 (N-tiled columns of W2^T)
        # b2_ref: (1, tile_n)        f32
        # o_ref:  (tile_m, tile_n)   out dtype
        # h_ref:  (tile_m, hidden)   bf16 scratch, persists across j
        @pl.when(pl.program_id(1) == 0)
        def _compute_hidden():
            xt = x_ref[...].astype(w1_ref.dtype)
            hidden = h_ref.shape[1]
            n_chunks = hidden // h_chunk if (hidden % h_chunk == 0) else 1
            if n_chunks <= 1:
                h = jnp.dot(xt, w1_ref[...], preferred_element_type=jnp.float32)
                h = h + b1_ref[...]              # bias in f32
                h = h * jax.nn.sigmoid(h)        # SiLU in f32 (EUP)
                h_ref[...] = h.astype(h_ref.dtype)
            else:
                # Chunk the hidden axis so the live f32 temporary stays small
                # (bounds VMEM/vreg pressure at large tile_m).
                def body(c, carry):
                    start = pl.multiple_of(c * h_chunk, 128)
                    h = jnp.dot(xt, w1_ref[:, pl.ds(start, h_chunk)],
                                preferred_element_type=jnp.float32)
                    h = h + b1_ref[:, pl.ds(start, h_chunk)]
                    h = h * jax.nn.sigmoid(h)
                    h_ref[:, pl.ds(start, h_chunk)] = h.astype(h_ref.dtype)
                    return carry

                lax.fori_loop(0, n_chunks, body, 0)

        o = jnp.dot(h_ref[...], w2_ref[...], preferred_element_type=jnp.float32)
        o_ref[...] = (o + b2_ref[...]).astype(o_ref.dtype)

    return kernel


def _small_m_kernel(x_ref, w1_ref, b1_ref, w2_ref, b2_ref, o_ref):
    """Small-M kernel: recompute h per w2 column tile (cheap at small M).

    Removes the cross-j dependency so both grid axes can be 'parallel'
    (v7x megacore splits the w2 column range across its two TensorCores).
    """
    xt = x_ref[...].astype(w1_ref.dtype)
    h = jnp.dot(xt, w1_ref[...], preferred_element_type=jnp.float32)
    h = h + b1_ref[...]
    h = h * jax.nn.sigmoid(h)
    h = h.astype(w2_ref.dtype)
    o = jnp.dot(h, w2_ref[...], preferred_element_type=jnp.float32)
    o_ref[...] = (o + b2_ref[...]).astype(o_ref.dtype)


# --------------------------------------------------------------------------- #
# Parameter prep + wrapper
# --------------------------------------------------------------------------- #
def prepare_mlp_embedder_params(w1, b1, w2, b2, *, compute_dtype=jnp.bfloat16):
    """One-time parameter prep (do NOT redo per forward call).

    PyTorch layouts in: w1 (hidden, in_dim), b1 (hidden,),
                        w2 (hidden, hidden), b2 (hidden,).
    Returns K-major bf16 weights and f32 row-vector biases.
    """
    hidden = w1.shape[0]
    w1t = jnp.asarray(jnp.transpose(w1), dtype=compute_dtype)  # (in_dim, hidden)
    w2t = jnp.asarray(jnp.transpose(w2), dtype=compute_dtype)  # (hidden, hidden)
    b1r = jnp.asarray(b1, dtype=jnp.float32).reshape(1, hidden)
    b2r = jnp.asarray(b2, dtype=jnp.float32).reshape(1, hidden)
    return w1t, b1r, w2t, b2r


def mlp_embedder(x, w1t, b1, w2t, b2, *, tile_m=None, tile_n=None, h_chunk=None,
                 small_m_threshold=256):
    """x: (..., in_dim). Params from prepare_mlp_embedder_params."""
    in_dim, hidden = w1t.shape
    lead = x.shape[:-1]
    compute_dtype = w1t.dtype
    out_dtype = x.dtype

    xm = x.reshape(-1, in_dim)  # no wrapper-side cast: tiles are cast in-kernel
    M = xm.shape[0]

    x_bpe = jnp.dtype(xm.dtype).itemsize
    w_bpe = jnp.dtype(compute_dtype).itemsize
    out_bpe = jnp.dtype(out_dtype).itemsize

    small_m = M <= small_m_threshold

    if small_m:
        # ----- small-M (Flux batch) regime: pure w2 weight-streaming ------- #
        tm = M if tile_m is None else min(tile_m, M)
        tn = min(1536, hidden) if tile_n is None else min(tile_n, hidden)
        grid = (pl.cdiv(M, tm), pl.cdiv(hidden, tn))
        w2_buffers = 1 if grid[1] == 1 else min(3, grid[0] * grid[1])

        footprint = (
            2 * tm * in_dim * x_bpe            # x tile (double buffered)
            + in_dim * hidden * w_bpe          # w1 (single buffered, const index)
            + hidden * 4                       # b1 (single buffered)
            + w2_buffers * hidden * tn * w_bpe # w2 tiles
            + 2 * tn * 4                       # b2 tile
            + 2 * tm * tn * out_bpe            # out tile
            + tm * hidden * 4                  # live f32 h
        )

        cost = pl.CostEstimate(
            flops=2 * M * hidden * (grid[1] * in_dim + hidden),
            transcendentals=M * hidden * grid[1],
            bytes_accessed=(xm.size * x_bpe + w1t.size * w_bpe + w2t.size * w_bpe
                            + b1.size * 4 + b2.size * 4 + M * hidden * out_bpe),
        )

        out = pl.pallas_call(
            _small_m_kernel,
            out_shape=jax.ShapeDtypeStruct((M, hidden), out_dtype),
            grid_spec=pltpu.PrefetchScalarGridSpec(
                num_scalar_prefetch=0,
                grid=grid,
                in_specs=[
                    _block_spec((tm, in_dim), lambda i, j: (i, 0)),
                    _block_spec((in_dim, hidden), lambda i, j: (0, 0), buffer_count=1),
                    _block_spec((1, hidden), lambda i, j: (0, 0), buffer_count=1),
                    _block_spec((hidden, tn), lambda i, j: (0, j),
                                buffer_count=w2_buffers),
                    _block_spec((1, tn), lambda i, j: (0, j)),
                ],
                out_specs=pl.BlockSpec((tm, tn), lambda i, j: (i, j)),
            ),
            compiler_params=pltpu.CompilerParams(
                # h recomputed per step -> no cross-j dependency -> both parallel.
                dimension_semantics=("parallel", "parallel"),
                vmem_limit_bytes=_vmem_limit(footprint + 4 * _MiB),
            ),
            cost_estimate=cost,
        )(xm, w1t, b1, w2t, b2)

    else:
        # ----- large-M regime: amortise w2 streaming over big M tiles ------ #
        if tile_m is None:
            if M >= 1024:
                tm = 1024
            elif M >= 512:
                tm = 512
            else:
                tm = M
        else:
            tm = min(tile_m, M)
        tn = min(512, hidden) if tile_n is None else min(tile_n, hidden)

        if h_chunk is not None:
            hc = h_chunk
        elif hidden <= 1024:
            hc = hidden
        else:
            hc = hidden
            for cand in (1024, 512, 256, 128):
                if hidden % cand == 0:
                    hc = cand
                    break

        grid = (pl.cdiv(M, tm), pl.cdiv(hidden, tn))

        footprint = (
            2 * tm * in_dim * x_bpe            # x tile
            + in_dim * hidden * w_bpe          # w1 (single buffered)
            + hidden * 4                       # b1 (single buffered)
            + 2 * hidden * tn * w_bpe          # w2 tile (double buffered)
            + 2 * tn * 4                       # b2 tile
            + 2 * tm * tn * out_bpe            # out tile
            + tm * hidden * w_bpe              # h scratch (bf16)
            + tm * hc * 4                      # live f32 h chunk
        )

        cost = pl.CostEstimate(
            flops=2 * M * hidden * (in_dim + hidden),
            transcendentals=M * hidden,
            bytes_accessed=(xm.size * x_bpe + w1t.size * w_bpe
                            + grid[0] * w2t.size * w_bpe
                            + b1.size * 4 + grid[0] * b2.size * 4
                            + M * hidden * out_bpe),
        )

        out = pl.pallas_call(
            _make_fused_kernel(hc),
            out_shape=jax.ShapeDtypeStruct((M, hidden), out_dtype),
            grid_spec=pltpu.PrefetchScalarGridSpec(
                num_scalar_prefetch=0,
                grid=grid,
                in_specs=[
                    _block_spec((tm, in_dim), lambda i, j: (i, 0)),
                    _block_spec((in_dim, hidden), lambda i, j: (0, 0), buffer_count=1),
                    _block_spec((1, hidden), lambda i, j: (0, 0), buffer_count=1),
                    _block_spec((hidden, tn), lambda i, j: (0, j)),
                    _block_spec((1, tn), lambda i, j: (0, j)),
                ],
                out_specs=pl.BlockSpec((tm, tn), lambda i, j: (i, j)),
                scratch_shapes=[pltpu.VMEM((tm, hidden), compute_dtype)],
            ),
            compiler_params=pltpu.CompilerParams(
                # j must be sequential: h scratch is reused across it.
                dimension_semantics=("parallel", "arbitrary"),
                vmem_limit_bytes=_vmem_limit(footprint + 4 * _MiB),
            ),
            cost_estimate=cost,
        )(xm, w1t, b1, w2t, b2)

    return out.reshape(*lead, hidden)


# --------------------------------------------------------------------------- #
# Reference + test
# --------------------------------------------------------------------------- #
def _reference(x, w1, b1, w2, b2, compute_dtype=jnp.bfloat16):
    # Precision-matched reference: bf16-rounded inputs / intermediate, f32 math.
    xc = x.astype(compute_dtype).astype(jnp.float32)
    w1c = w1.astype(compute_dtype).astype(jnp.float32)
    w2c = w2.astype(compute_dtype).astype(jnp.float32)
    h = xc @ w1c.T + b1
    h = h * jax.nn.sigmoid(h)
    h = h.astype(compute_dtype).astype(jnp.float32)
    return (h @ w2c.T + b2).astype(x.dtype)


if __name__ == "__main__":
    # Small shapes consistent with MLPEmbedder usage, lane-friendly hidden.
    batch, seq, in_dim, hidden = 2, 8, 64, 256

    key = jax.random.PRNGKey(0)
    kx, k1, k2, k3, k4 = jax.random.split(key, 5)

    x = jax.random.normal(kx, (batch, seq, in_dim), dtype=jnp.float32)
    # PyTorch nn.Linear parameter layouts: weight (out, in), bias (out,)
    w1 = jax.random.normal(k1, (hidden, in_dim), dtype=jnp.float32) * 0.05
    b1 = jax.random.normal(k2, (hidden,), dtype=jnp.float32) * 0.05
    w2 = jax.random.normal(k3, (hidden, hidden), dtype=jnp.float32) * 0.05
    b2 = jax.random.normal(k4, (hidden,), dtype=jnp.float32) * 0.05

    # One-time parameter prep (transpose + bf16 cast hoisted out of the call).
    w1t, b1r, w2t, b2r = prepare_mlp_embedder_params(w1, b1, w2, b2)

    # 1) Small-M path (recompute-h, both grid axes parallel, multi-step j).
    out = mlp_embedder(x, w1t, b1r, w2t, b2r, tile_n=128)
    out = jax.block_until_ready(out)
    ref = _reference(x, w1, b1, w2, b2)
    assert out.shape == (batch, seq, hidden), out.shape
    err = float(jnp.max(jnp.abs(out - ref)))
    assert jnp.allclose(out, ref, atol=1e-2, rtol=1e-2), err

    # 2) Large-M path (h scratch reused across j, chunked h compute).
    xl = jax.random.normal(kx, (512, in_dim), dtype=jnp.float32)
    outl = mlp_embedder(xl, w1t, b1r, w2t, b2r, tile_m=512, tile_n=128, h_chunk=128)
    outl = jax.block_until_ready(outl)
    refl = _reference(xl, w1, b1, w2, b2)
    errl = float(jnp.max(jnp.abs(outl - refl)))
    assert jnp.allclose(outl, refl, atol=1e-2, rtol=1e-2), errl

    print("KERNEL_OK")
</pallas_src>

<mosaic_0001>
module attributes {stable_mosaic.version = 11 : i64} {
  func.func @_small_m_kernel(%arg0: i32, %arg1: i32, %arg2: memref<16x64xf32, #tpu.memory_space<vmem>>, %arg3: memref<64x256xbf16, #tpu.memory_space<vmem>>, %arg4: memref<1x256xf32, #tpu.memory_space<vmem>>, %arg5: memref<256x128xbf16, #tpu.memory_space<vmem>>, %arg6: memref<1x128xf32, #tpu.memory_space<vmem>>, %arg7: memref<16x128xf32, #tpu.memory_space<vmem>>) attributes {dimension_semantics = [#tpu.dimension_semantics<parallel>, #tpu.dimension_semantics<parallel>], iteration_bounds = array<i64: 1, 2>, scalar_prefetch = 0 : i64, scratch_operands = 0 : i64, tpu.core_type = #tpu.core_type<tc>, window_params = [{transform_indices = @transform_0, window_bounds = array<i64: 16, 64>}, {pipeline_mode = #tpu.pipeline_mode<synchronous>, transform_indices = @transform_1, window_bounds = array<i64: 64, 256>}, {pipeline_mode = #tpu.pipeline_mode<synchronous>, transform_indices = @transform_2, window_bounds = array<i64: 1, 256>}, {pipeline_mode = #tpu.pipeline_mode<double_buffered>, transform_indices = @transform_3, window_bounds = array<i64: 256, 128>}, {transform_indices = @transform_4, window_bounds = array<i64: 1, 128>}, {transform_indices = @transform_5, window_bounds = array<i64: 16, 128>}]} {
    %c0 = arith.constant 0 : index
    %c0_0 = arith.constant 0 : index
    %0 = vector.load %arg2[%c0, %c0_0] : memref<16x64xf32, #tpu.memory_space<vmem>>, vector<16x64xf32>
    %1 = arith.truncf %0 : vector<16x64xf32> to vector<16x64xbf16>
    %c0_1 = arith.constant 0 : index
    %c0_2 = arith.constant 0 : index
    %2 = vector.load %arg3[%c0_1, %c0_2] : memref<64x256xbf16, #tpu.memory_space<vmem>>, vector<64x256xbf16>
    %cst = arith.constant dense<0.000000e+00> : vector<16x256xf32>
    %3 = tpu.matmul %1, %2, %cst {dimension_numbers = #tpu.dot_dimension_numbers<[1], [0], [0], [1], [0, 0, 1, 1], [], []>} : vector<16x64xbf16>, vector<64x256xbf16>, vector<16x256xf32> -> vector<16x256xf32>
    %c0_3 = arith.constant 0 : index
    %c0_4 = arith.constant 0 : index
    %4 = vector.load %arg4[%c0_3, %c0_4] : memref<1x256xf32, #tpu.memory_space<vmem>>, vector<1x256xf32>
    %5 = vector.broadcast %4 : vector<1x256xf32> to vector<16x256xf32>
    %6 = arith.addf %3, %5 : vector<16x256xf32>
    %7 = arith.negf %6 : vector<16x256xf32>
    %8 = math.exp %7 : vector<16x256xf32>
    %cst_5 = arith.constant 1.000000e+00 : f32
    %9 = vector.broadcast %cst_5 : f32 to vector<16x256xf32>
    %10 = arith.addf %9, %8 : vector<16x256xf32>
    %11 = arith.divf %9, %10 : vector<16x256xf32>
    %12 = arith.mulf %6, %11 : vector<16x256xf32>
    %13 = arith.truncf %12 : vector<16x256xf32> to vector<16x256xbf16>
    %c0_6 = arith.constant 0 : index
    %c0_7 = arith.constant 0 : index
    %14 = vector.load %arg5[%c0_6, %c0_7] : memref<256x128xbf16, #tpu.memory_space<vmem>>, vector<256x128xbf16>
    %cst_8 = arith.constant dense<0.000000e+00> : vector<16x128xf32>
    %15 = tpu.matmul %13, %14, %cst_8 {dimension_numbers = #tpu.dot_dimension_numbers<[1], [0], [0], [1], [0, 0, 1, 1], [], []>} : vector<16x256xbf16>, vector<256x128xbf16>, vector<16x128xf32> -> vector<16x128xf32>
    %c0_9 = arith.constant 0 : index
    %c0_10 = arith.constant 0 : index
    %16 = vector.load %arg6[%c0_9, %c0_10] : memref<1x128xf32, #tpu.memory_space<vmem>>, vector<1x128xf32>
    %17 = vector.broadcast %16 : vector<1x128xf32> to vector<16x128xf32>
    %18 = arith.addf %15, %17 : vector<16x128xf32>
    %c0_11 = arith.constant 0 : index
    %c0_12 = arith.constant 0 : index
    %19 = vector.load %arg7[%c0_11, %c0_12] : memref<16x128xf32, #tpu.memory_space<vmem>>, vector<16x128xf32>
    tpu.vector_store %arg7[%c0_11, %c0_12], %18 {strides = array<i32>} : memref<16x128xf32, #tpu.memory_space<vmem>>, vector<16x128xf32>,
    return
  }
  func.func @transform_0(%arg0: i32, %arg1: i32) -> (i32, i32) {
    %c0_i32 = arith.constant 0 : i32
    %c0_i32_0 = arith.constant 0 : i32
    return %arg0, %c0_i32 : i32, i32
  }
  func.func @transform_1(%arg0: i32, %arg1: i32) -> (i32, i32) {
    %c0_i32 = arith.constant 0 : i32
    %c0_i32_0 = arith.constant 0 : i32
    %c0_i32_1 = arith.constant 0 : i32
    return %c0_i32, %c0_i32_0 : i32, i32
  }
  func.func @transform_2(%arg0: i32, %arg1: i32) -> (i32, i32) {
    %c0_i32 = arith.constant 0 : i32
    %c0_i32_0 = arith.constant 0 : i32
    %c0_i32_1 = arith.constant 0 : i32
    return %c0_i32, %c0_i32_0 : i32, i32
  }
  func.func @transform_3(%arg0: i32, %arg1: i32) -> (i32, i32) {
    %c0_i32 = arith.constant 0 : i32
    %c0_i32_0 = arith.constant 0 : i32
    return %c0_i32, %arg1 : i32, i32
  }
  func.func @transform_4(%arg0: i32, %arg1: i32) -> (i32, i32) {
    %c0_i32 = arith.constant 0 : i32
    %c0_i32_0 = arith.constant 0 : i32
    return %c0_i32, %arg1 : i32, i32
  }
  func.func @transform_5(%arg0: i32, %arg1: i32) -> (i32, i32) {
    %c0_i32 = arith.constant 0 : i32
    return %arg0, %arg1 : i32, i32
  }
}

</mosaic_0001>

<llo_original>
// kernel: tpu_custom_call.1
$region0: #{tpu_custom_call.1}
  #allocation0 [shape = 'u32[]', space=smem, size = 0x4, offset = 0x4, fixed_abs, tag = 'smem constant byte address 0x4 - core index']
  #allocation1 [shape = 'u32[144,128]{1,0:T(1,128)}', space=vmem, size = 0x12000, scoped, tag = 'internal scratch']
  %s0 = inlined_call_operand.hbm [shape: f32[16,64], index: 0, kind: input, shape index: {}]
  %s1 = inlined_call_operand.hbm [shape: bf16[64,256], index: 1, kind: input, shape index: {}]
  %s2 = inlined_call_operand.vmem [shape: f32[1,256], index: 2, kind: input, shape index: {}]
  %s3 = inlined_call_operand.hbm [shape: bf16[256,256], index: 3, kind: input, shape index: {}]
  %s4 = inlined_call_operand.vmem [shape: f32[1,256], index: 4, kind: input, shape index: {}]
  %s5 = inlined_call_operand.hbm [shape: f32[16,256], index: 5, kind: output, shape index: {}]
  %s6 = sld [smem:[#allocation0]]
  $region65: #{tpu_custom_call.1} parent=0
    _
  %s8 = ssub.s32 1, %s6
  %s9 = scalar_select 0, %s8, %s6
  $region1: #{tpu_custom_call.1} parent=0
    #allocation2 [shape = 'u8[8192]{0}', space=vmem, size = 0x2000, scoped, tag = 'input window, operand 0, single buffered']
    #allocation3 [shape = 's32[2]{0}', space=sflag, size = 0x8, scoped, tag = 'scoped memory for tpu_custom_call.1']
    #allocation4 [shape = 's32[2]{0}', space=sflag, size = 0x8, scoped, tag = 'scoped memory for tpu_custom_call.1']
    #allocation5 [shape = 'u8[32768]{0}', space=vmem, size = 0x8000, scoped, tag = 'input window, operand 1, single buffered']
    #allocation6 [shape = 's32[1]{0}', space=sflag, size = 0x4, scoped, tag = 'scoped memory for tpu_custom_call.1']
    #allocation7 [shape = 'u8[131072]{0}', space=vmem, size = 0x20000, scoped, tag = 'input window, operand 3']
    #allocation8 [shape = 'u8[16384]{0}', space=vmem, size = 0x4000, scoped, tag = 'output window, operand 0']
    %10 = vsyncpa [#allocation3], 0
    %11 = vsyncpa [#allocation6], 0
    %12 = vsyncpa [#allocation4], 0
    %s13 = scalar_lea.sflag [#allocation4], 1
    %14 = vsyncpa %s13, 0
    loop: start=0, step=1, limit=4
    $region2: #{tpu_custom_call.1} parent=1 // loop_pre_header
      _
    $region3: #{tpu_custom_call.1} parent=1 // loop_header
      %s16 = sphi 0, %s20
      %p17 = scmp.ge.s32.totalorder %s16, 4
      %s23 = sphi 0, %s35
      %s24 = sphi 0, %s31
      %s25 = sphi 0, %s23
      %s26 = sphi 0, %s24
      %s27 = sphi 0, %s25
      %s28 = sphi 0, %s26
      %s38 = sphi 0, %s40
      %s41 = sphi 0, %s38
      %s42 = sphi 0, %s41
      %s58 = sphi 0, %s42
      %s62 = sphi 0, %s62
      %s64 = sphi 0, %s62
      %s65 = sphi 0, %s64
      %s79 = sphi 0, %s65
      %s83 = sphi 0, %s83
      %s85 = sphi 0, %s83
      %s86 = sphi 0, %s85
      %s100 = sphi 0, %s86
      %s106 = sphi 0, %s108
      %s109 = sphi 0, %s106
      %s110 = sphi 0, %s109
      %s126 = sphi 0, %s110
      %s132 = sphi 0, %s134
      %s135 = sphi 0, %s132
      %s136 = sphi 0, %s135
      %s152 = sphi 0, %s136
      %s160 = sphi 0, %s162
      %s163 = sphi 0, %s160
      %s164 = sphi 0, %s163
      %s180 = sphi 0, %s164
    $region4: #{tpu_custom_call.1} parent=1 // loop_header_branch
      %19 = sbr.rel (%p17) target = $region8
    $region5: #{tpu_custom_call.1} parent=1 // loop_body
      %s21 = ssub.s32 %s16, 1
      %s22 = ssub.s32 %s16, 2
      %s29 = sadd.s32 1, %s24
      %p30 = scmp.ge.s32.totalorder %s29, 2
      %s31 = scalar_select %p30, 0, %s29
      %s32 = sadd.s32 1, %s23
      %s33 = scalar_select %p30, %s32, %s23
      %p34 = scmp.ge.s32.totalorder %s33, 1
      %s35 = scalar_select %p34, 0, %s33
      %s36 = ssub.s32 %s23, %s35
      %p37 = scmp.eq.s32.totalorder %s36, 0
      %s39 = sadd.s32 %s38, 1
      %s40 = scalar_select %p37, %s38, %s39
      %p43 = pneg %p37
      %p44 = scmp.eq.s32.totalorder %s16, 1
      %p45 = por %p43, %p44
      %p46 = scmp.ne.s32.totalorder %s38, %s41
      %p47 = scmp.eq.s32.totalorder %s16, 0
      %p48 = por %p46, %p47
      %p49 = scmp.ne.s32.totalorder %s38, %s41
      %p50 = scmp.eq.s32.totalorder %s21, 1
      %p51 = por %p49, %p50
      %p52 = scmp.ne.s32.totalorder %s41, %s42
      %p53 = scmp.eq.s32.totalorder %s21, 0
      %p54 = por %p52, %p53
      %p55 = scmp.ne.s32.totalorder %s41, %s42
      %p56 = scmp.eq.s32.totalorder %s22, 1
      %p57 = por %p55, %p56
      %p59 = scmp.ne.s32.totalorder %s42, %s58
      %p60 = scmp.eq.s32.totalorder %s22, 0
      %p61 = por %p59, %p60
      %s63 = sadd.s32 %s62, 1
      %p66 = scmp.eq.s32.totalorder %s16, 1
      %p67 = scmp.ne.s32.totalorder %s62, %s64
      %p68 = scmp.eq.s32.totalorder %s16, 0
      %p69 = por %p67, %p68
      %p70 = scmp.ne.s32.totalorder %s62, %s64
      %p71 = scmp.eq.s32.totalorder %s21, 1
      %p72 = por %p70, %p71
      %p73 = scmp.ne.s32.totalorder %s64, %s65
      %p74 = scmp.eq.s32.totalorder %s21, 0
      %p75 = por %p73, %p74
      %p76 = scmp.ne.s32.totalorder %s64, %s65
      %p77 = scmp.eq.s32.totalorder %s22, 1
      %p78 = por %p76, %p77
      %p80 = scmp.ne.s32.totalorder %s65, %s79
      %p81 = scmp.eq.s32.totalorder %s22, 0
      %p82 = por %p80, %p81
      %s84 = sadd.s32 %s83, 1
      %p87 = scmp.eq.s32.totalorder %s16, 1
      %p88 = scmp.ne.s32.totalorder %s83, %s85
      %p89 = scmp.eq.s32.totalorder %s16, 0
      %p90 = por %p88, %p89
      %p91 = scmp.ne.s32.totalorder %s83, %s85
      %p92 = scmp.eq.s32.totalorder %s21, 1
      %p93 = por %p91, %p92
      %p94 = scmp.ne.s32.totalorder %s85, %s86
      %p95 = scmp.eq.s32.totalorder %s21, 0
      %p96 = por %p94, %p95
      %p97 = scmp.ne.s32.totalorder %s85, %s86
      %p98 = scmp.eq.s32.totalorder %s22, 1
      %p99 = por %p97, %p98
      %p101 = scmp.ne.s32.totalorder %s86, %s100
      %p102 = scmp.eq.s32.totalorder %s22, 0
      %p103 = por %p101, %p102
      %s104 = ssub.s32 %s24, %s31
      %p105 = scmp.eq.s32.totalorder %s104, 0
      %s107 = sadd.s32 %s106, 1
      %s108 = scalar_select %p105, %s106, %s107
      %p111 = pneg %p105
      %p112 = scmp.eq.s32.totalorder %s16, 1
      %p113 = por %p111, %p112
      %p114 = scmp.ne.s32.totalorder %s106, %s109
      %p115 = scmp.eq.s32.totalorder %s16, 0
      %p116 = por %p114, %p115
      %p117 = scmp.ne.s32.totalorder %s106, %s109
      %p118 = scmp.eq.s32.totalorder %s21, 1
      %p119 = por %p117, %p118
      %p120 = scmp.ne.s32.totalorder %s109, %s110
      %p121 = scmp.eq.s32.totalorder %s21, 0
      %p122 = por %p120, %p121
      %p123 = scmp.ne.s32.totalorder %s109, %s110
      %p124 = scmp.eq.s32.totalorder %s22, 1
      %p125 = por %p123, %p124
      %p127 = scmp.ne.s32.totalorder %s110, %s126
      %p128 = scmp.eq.s32.totalorder %s22, 0
      %p129 = por %p127, %p128
      %s130 = ssub.s32 %s24, %s31
      %p131 = scmp.eq.s32.totalorder %s130, 0
      %s133 = sadd.s32 %s132, 1
      %s134 = scalar_select %p131, %s132, %s133
      %p137 = pneg %p131
      %p138 = scmp.eq.s32.totalorder %s16, 1
      %p139 = por %p137, %p138
      %p140 = scmp.ne.s32.totalorder %s132, %s135
      %p141 = scmp.eq.s32.totalorder %s16, 0
      %p142 = por %p140, %p141
      %p143 = scmp.ne.s32.totalorder %s132, %s135
      %p144 = scmp.eq.s32.totalorder %s21, 1
      %p145 = por %p143, %p144
      %p146 = scmp.ne.s32.totalorder %s135, %s136
      %p147 = scmp.eq.s32.totalorder %s21, 0
      %p148 = por %p146, %p147
      %p149 = scmp.ne.s32.totalorder %s135, %s136
      %p150 = scmp.eq.s32.totalorder %s22, 1
      %p151 = por %p149, %p150
      %p153 = scmp.ne.s32.totalorder %s136, %s152
      %p154 = scmp.eq.s32.totalorder %s22, 0
      %p155 = por %p153, %p154
      %s156 = ssub.s32 %s23, %s35
      %s157 = ssub.s32 %s24, %s31
      %s158 = sor.u32 %s156, %s157
      %p159 = scmp.eq.s32.totalorder %s158, 0
      %s161 = sadd.s32 %s160, 1
      %s162 = scalar_select %p159, %s160, %s161
      %p165 = pneg %p159
      %p166 = scmp.eq.s32.totalorder %s16, 1
      %p167 = por %p165, %p166
      %p168 = scmp.ne.s32.totalorder %s160, %s163
      %p169 = scmp.eq.s32.totalorder %s16, 0
      %p170 = por %p168, %p169
      %p171 = scmp.ne.s32.totalorder %s160, %s163
      %p172 = scmp.eq.s32.totalorder %s21, 1
      %p173 = por %p171, %p172
      %p174 = scmp.ne.s32.totalorder %s163, %s164
      %p175 = scmp.eq.s32.totalorder %s21, 0
      %p176 = por %p174, %p175
      %p177 = scmp.ne.s32.totalorder %s163, %s164
      %p178 = scmp.eq.s32.totalorder %s22, 1
      %p179 = por %p177, %p178
      %p181 = scmp.ne.s32.totalorder %s164, %s180
      %p182 = scmp.eq.s32.totalorder %s22, 0
      %p183 = por %p181, %p182
      %p184 = scmp.le.s32.totalorder 1, %s16
      %p185 = scmp.lt.s32.totalorder %s16, 3
      %p186 = pnand %p184, %p185
      %p187 = pneg %p186
      // Predicated region
      $region9: #{tpu_custom_call.1} parent=5 // pred_check
        _
      $region10: #{tpu_custom_call.1} parent=5 // pred_check_branch
        %189 = sbr.rel (%p186) target = $region12
      $region11: #{tpu_custom_call.1} parent=5 // pred_region
        %s190 = ssub.s32 %s16, 1
        // Predicated region
        $region13: #{tpu_custom_call.1} parent=11 // pred_check
          %p191 = pneg %p54
        $region14: #{tpu_custom_call.1} parent=11 // pred_check_branch
          %193 = sbr.rel (%p191) target = $region16
        $region15: #{tpu_custom_call.1} parent=11 // pred_region
          %s194 = smul.u32 2, %s25
          %s196 = ssub.s32 256, 256
          %197 = vsyncadd [#allocation3], %s196
          %s198 = smul.addr %s194, 128
          %s199 = scalar_lea.hbm %s0, %s198
          %s200 = sshll.u32 [#allocation2], 4
          %s201 = int_to_ptr.vmem [resolvable:$true] %s200
          %206 = dma.hbm_to_vmem [thread:$0]  %s199, 256, %s201, [#allocation3], 128, 128, 8
        $region16: #{tpu_custom_call.1} parent=11 // pred_fallthru
          _
        // Predicated region
        $region17: #{tpu_custom_call.1} parent=11 // pred_check
          %p207 = pneg %p75
        $region18: #{tpu_custom_call.1} parent=11 // pred_check_branch
          %209 = sbr.rel (%p207) target = $region20
        $region19: #{tpu_custom_call.1} parent=11 // pred_region
          %s211 = ssub.s32 1024, 1024
          %212 = vsyncadd [#allocation6], %s211
          %s213 = sshll.u32 [#allocation5], 4
          %s214 = int_to_ptr.vmem [resolvable:$true] %s213
          %219 = dma.hbm_to_vmem [thread:$0]  %s1, 1024, %s214, [#allocation6], 128, 128, 8
        $region20: #{tpu_custom_call.1} parent=11 // pred_fallthru
          _
        // Predicated region
        $region21: #{tpu_custom_call.1} parent=11 // pred_check
          %p220 = pneg %p96
        $region22: #{tpu_custom_call.1} parent=11 // pred_check_branch
          %222 = sbr.rel (%p220) target = $region24
        $region23: #{tpu_custom_call.1} parent=11 // pred_region
          _
        $region24: #{tpu_custom_call.1} parent=11 // pred_fallthru
          _
      $region12: #{tpu_custom_call.1} parent=5 // pred_fallthru
        _
      %p223 = scmp.lt.s32.totalorder %s16, 2
      // Predicated region
      $region25: #{tpu_custom_call.1} parent=5 // pred_check
        %p224 = pneg %p223
      $region26: #{tpu_custom_call.1} parent=5 // pred_check_branch
        %226 = sbr.rel (%p224) target = $region28
      $region27: #{tpu_custom_call.1} parent=5 // pred_region
        // Predicated region
        $region29: #{tpu_custom_call.1} parent=27 // pred_check
          %p227 = pneg %p116
        $region30: #{tpu_custom_call.1} parent=27 // pred_check_branch
          %229 = sbr.rel (%p227) target = $region32
        $region31: #{tpu_custom_call.1} parent=27 // pred_region
          %s230 = sand.u32 %s16, 1
          %s231 = scalar_lea.sflag [#allocation3], %s230
          %s232 = sand.u32 %s106, 1
          %s233 = smul.addr %s232, 128
          %s234 = scalar_lea.vmem [#allocation7], %s233
          %s236 = ssub.s32 2048, 2048
          %237 = vsyncadd %s231, %s236
          %s238 = smul.addr %s24, 64
          %s239 = scalar_lea.hbm %s3, %s238
          %s240 = sshll.u32 %s234, 4
          %s241 = int_to_ptr.vmem [resolvable:$true] %s240
          %246 = dma.hbm_to_vmem [thread:$0]  %s239, 2048, %s241, %s231, 128, 64, 4
        $region32: #{tpu_custom_call.1} parent=27 // pred_fallthru
          _
        // Predicated region
        $region33: #{tpu_custom_call.1} parent=27 // pred_check
          %p247 = pneg %p142
        $region34: #{tpu_custom_call.1} parent=27 // pred_check_branch
          %249 = sbr.rel (%p247) target = $region36
        $region35: #{tpu_custom_call.1} parent=27 // pred_region
          %p250 = scmp.lt.s32.totalorder %s24, 1
          %s251 = scalar_select %p250, %s24, 1
          %s252 = scalar_lea.vmem %s4, %s251
        $region36: #{tpu_custom_call.1} parent=27 // pred_fallthru
          _
      $region28: #{tpu_custom_call.1} parent=5 // pred_fallthru
        _
      %p253 = scmp.le.s32.totalorder 1, %s16
      %p254 = scmp.lt.s32.totalorder %s16, 3
      %p255 = pnand %p253, %p254
      %p256 = pneg %p255
      // Predicated region
      $region37: #{tpu_custom_call.1} parent=5 // pred_check
        _
      $region38: #{tpu_custom_call.1} parent=5 // pred_check_branch
        %258 = sbr.rel (%p255) target = $region40
      $region39: #{tpu_custom_call.1} parent=5 // pred_region
        %s259 = ssub.s32 %s16, 1
        // Predicated region
        $region41: #{tpu_custom_call.1} parent=39 // pred_check
          %p260 = pneg %p54
        $region42: #{tpu_custom_call.1} parent=39 // pred_check_branch
          %262 = sbr.rel (%p260) target = $region44
        $region43: #{tpu_custom_call.1} parent=39 // pred_region
          %263 = dma.done [#allocation3], 256
        $region44: #{tpu_custom_call.1} parent=39 // pred_fallthru
          _
        // Predicated region
        $region45: #{tpu_custom_call.1} parent=39 // pred_check
          %p264 = pneg %p75
        $region46: #{tpu_custom_call.1} parent=39 // pred_check_branch
          %266 = sbr.rel (%p264) target = $region48
        $region47: #{tpu_custom_call.1} parent=39 // pred_region
          %267 = dma.done [#allocation6], 1024
        $region48: #{tpu_custom_call.1} parent=39 // pred_fallthru
          _
        %s268 = sand.u32 %s21, 1
        %s269 = scalar_lea.sflag [#allocation3], %s268
        %s270 = sand.u32 %s109, 1
        %s271 = smul.addr %s270, 128
        %s272 = scalar_lea.vmem [#allocation7], %s271
        // Predicated region
        $region49: #{tpu_custom_call.1} parent=39 // pred_check
          %p273 = pneg %p122
        $region50: #{tpu_custom_call.1} parent=39 // pred_check_branch
          %275 = sbr.rel (%p273) target = $region52
        $region51: #{tpu_custom_call.1} parent=39 // pred_region
          %276 = dma.done %s269, 2048
        $region52: #{tpu_custom_call.1} parent=39 // pred_fallthru
          _
        %p277 = pneg %p54
        %p278 = pneg %p51
        %p279 = pneg %p75
        %p280 = pneg %p72
        %p281 = pneg %p96
        %p282 = pneg %p93
        %s283 = sand.u32 %s21, 1
        %s284 = scalar_lea.sflag [#allocation3], %s283
        %s285 = sand.u32 %s109, 1
        %s286 = smul.addr %s285, 128
        %s287 = scalar_lea.vmem [#allocation7], %s286
        %p288 = pneg %p122
        %p289 = pneg %p119
        %p290 = scmp.lt.s32.totalorder %s26, 1
        %s291 = scalar_select %p290, %s26, 1
        %s292 = scalar_lea.vmem %s4, %s291
        %p293 = pneg %p148
        %p294 = pneg %p145
        %p295 = pneg %p176
        %p296 = pneg %p173
        %s297 = sand.u32 %s163, 1
        %s298 = scalar_lea.sflag [#allocation4], %s297
        %s299 = sand.u32 %s163, 1
        %s300 = smul.addr %s299, 16
        %s301 = scalar_lea.vmem [#allocation8], %s300
        %s302 = smul.u32 2, %s25
        %p303 = scmp.lt.s32.totalorder %s26, 1
        %s304 = scalar_select %p303, %s26, 1
        %s305 = scalar_lea.vmem %s4, %s304
        %s306 = smul.u32 2, %s25
        %v308 = vld [vmem:[#allocation2] sm:$0xff]
        %v309 = vld [vmem:[#allocation2 + $0x8] sm:$0xff]
        %v310 = vpack.c.bf16 %v309, %v308
        %v311 = vld [vmem:[#allocation5] sm:$0xff]
        %v312 = vld [vmem:[#allocation5 + $0x8] sm:$0xff]
        %v313 = vld [vmem:[#allocation5 + $0x10] sm:$0xff]
        %v314 = vld [vmem:[#allocation5 + $0x18] sm:$0xff]
        %v315 = vld [vmem:[#allocation5 + $0x20] sm:$0xff]
        %v316 = vld [vmem:[#allocation5 + $0x28] sm:$0xff]
        %v317 = vld [vmem:[#allocation5 + $0x30] sm:$0xff]
        %v318 = vld [vmem:[#allocation5 + $0x38] sm:$0xff]
        %v319 = vld [vmem:[%s2] sm:$0x3]
        %v321 = vlaneseq
        %v322 = vshrl.u32 %v321, 7
        %v323 = vsub.s32 0, %v322
        %v324 = vrot.slane %v319, %v323
        %v325 = vlaneseq
        %v326 = vshrl.u32 %v325, 7
        %v327 = vsub.s32 1, %v326
        %v328 = vrot.slane %v319, %v327
        %v339 = vunpack.c.l.b16 %v311
        %v340 = vunpack.c.h.b16 %v311
        %v341 = vunpack.c.l.b16 %v312
        %v342 = vunpack.c.h.b16 %v312
        %v343 = vunpack.c.l.b16 %v313
        %v344 = vunpack.c.h.b16 %v313
        %v345 = vunpack.c.l.b16 %v314
        %v346 = vunpack.c.h.b16 %v314
        %v347 = vunpack.c.l.b16 %v315
        %v348 = vunpack.c.h.b16 %v315
        %v349 = vunpack.c.l.b16 %v316
        %v350 = vunpack.c.h.b16 %v316
        %v351 = vunpack.c.l.b16 %v317
        %v352 = vunpack.c.h.b16 %v317
        %v353 = vunpack.c.l.b16 %v318
        %v354 = vunpack.c.h.b16 %v318
        %v355 = vpack.c.b16 %v341, %v339
        %v356 = vpack.c.b16 %v342, %v340
        %v357 = vpack.c.b16 %v345, %v343
        %v358 = vpack.c.b16 %v346, %v344
        %v359 = vpack.c.b16 %v349, %v347
        %v360 = vpack.c.b16 %v350, %v348
        %v361 = vpack.c.b16 %v353, %v351
        %v362 = vpack.c.b16 %v354, %v352
        %vm371 = vcmask 523264
        %v373 = vsel %vm371, %v310, 0
        %375 = vmatprep.subr.bf16.mxu0 %v356
        %376 = vmatpush1.bf16.msra.mxu0 %v355
        %377 = vmatprep.subr.bf16.mxu0 %v358
        %378 = vmatpush1.bf16.msra.mxu0 %v357
        %379 = vmatprep.subr.bf16.mxu0 %v360
        %380 = vmatpush1.bf16.msra.mxu0 %v359
        %381 = vmatprep.subr.bf16.mxu0 %v362
        %382 = vmatpush1.bf16.msra.mxu0 %v361
        %383 = vmatprep.subr.bf16.mxu0 0
        %384 = vmatpush1.bf16.msra.mxu0 0
        %385 = vmatprep.subr.bf16.mxu0 0
        %386 = vmatpush1.bf16.msra.mxu0 0
        %387 = vmatprep.subr.bf16.mxu0 0
        %388 = vmatpush1.bf16.msra.mxu0 0
        %389 = vmatprep.subr.bf16.mxu0 0
        %390 = vmatpush1.bf16.msra.mxu0 0
        %391 = vmatprep.subr.bf16.mxu0 0
        %392 = vmatpush1.bf16.msra.mxu0 0
        %393 = vmatprep.subr.bf16.mxu0 0
        %394 = vmatpush1.bf16.msra.mxu0 0
        %395 = vmatprep.subr.bf16.mxu0 0
        %396 = vmatpush1.bf16.msra.mxu0 0
        %397 = vmatprep.subr.bf16.mxu0 0
        %398 = vmatpush1.bf16.msra.mxu0 0
        %399 = vmatprep.subr.bf16.mxu0 0
        %400 = vmatpush1.bf16.msra.mxu0 0
        %401 = vmatprep.subr.bf16.mxu0 0
        %402 = vmatpush1.bf16.msra.mxu0 0
        %403 = vmatprep.subr.bf16.mxu0 0
        %404 = vmatpush1.bf16.msra.mxu0 0
        %405 = vmatprep.subr.bf16.mxu0 0
        %406 = vmatpush1.bf16.msra.mxu0 0
        %407 = vmatprep.mubr.bf16.mxu0 0
        %408 = vmatmul.mubr.bf16.gmra.mrb[0].mxu0 %v373
        %v409 = vpop.f32.mrb[0].mxu0
        %v410 = vadd.f32 %v324, %v409
        %v411 = vpop.f32.mrb[0].mxu0
        %v412 = vadd.f32 %v328, %v411
        %v413 = vpop.f32.mrb[0].mxu0
        %v414 = vadd.f32 %v324, %v413
        %v415 = vpop.f32.mrb[0].mxu0
        %v416 = vadd.f32 %v328, %v415
        %417 = vdwg.mxu0
        %v418 = vxor.u32 %v410, 2147483648
        %v419 = vxor.u32 %v412, 2147483648
        %v420 = vxor.u32 %v414, 2147483648
        %v421 = vxor.u32 %v416, 2147483648
        %v422 = vmul.f32 %v418, 1.442695
        %v423 = vpow.pop %v422
        %v424 = vmul.f32 %v419, 1.442695
        %v425 = vpow.pop %v424
        %v426 = vmul.f32 %v420, 1.442695
        %v427 = vpow.pop %v426
        %v428 = vmul.f32 %v421, 1.442695
        %v429 = vpow.pop %v428
        %v430 = vadd.f32 %v423, 1.0
        %v431 = vadd.f32 %v425, 1.0
        %v432 = vadd.f32 %v427, 1.0
        %v433 = vadd.f32 %v429, 1.0
        %v434 = vrcp.pop %v430
        %v435 = vmul.f32 1.0, %v434
        %v436 = vrcp.pop %v431
        %v437 = vmul.f32 1.0, %v436
        %v438 = vrcp.pop %v432
        %v439 = vmul.f32 1.0, %v438
        %v440 = vrcp.pop %v433
        %v441 = vmul.f32 1.0, %v440
        %v442 = vmul.f32 %v410, %v435
        %v443 = vmul.f32 %v412, %v437
        %v444 = vmul.f32 %v414, %v439
        %v445 = vmul.f32 %v416, %v441
        %v446 = vpack.c.bf16 %v444, %v442
        %v447 = vpack.c.bf16 %v445, %v443
        %v448 = vld [vmem:[%s272] sm:$0xf]
        %v449 = vld [vmem:[%s272 + $0x4] sm:$0xf]
        %v450 = vld [vmem:[%s272 + $0x8] sm:$0xf]
        %v451 = vld [vmem:[%s272 + $0xc] sm:$0xf]
        %v452 = vld [vmem:[%s272 + $0x10] sm:$0xf]
        %v453 = vld [vmem:[%s272 + $0x14] sm:$0xf]
        %v454 = vld [vmem:[%s272 + $0x18] sm:$0xf]
        %v455 = vld [vmem:[%s272 + $0x1c] sm:$0xf]
        %v456 = vld [vmem:[%s272 + $0x20] sm:$0xf]
        %v457 = vld [vmem:[%s272 + $0x24] sm:$0xf]
        %v458 = vld [vmem:[%s272 + $0x28] sm:$0xf]
        %v459 = vld [vmem:[%s272 + $0x2c] sm:$0xf]
        %v460 = vld [vmem:[%s272 + $0x30] sm:$0xf]
        %v461 = vld [vmem:[%s272 + $0x34] sm:$0xf]
        %v462 = vld [vmem:[%s272 + $0x38] sm:$0xf]
        %v463 = vld [vmem:[%s272 + $0x3c] sm:$0xf]
        %v464 = vld [vmem:[%s272 + $0x40] sm:$0xf]
        %v465 = vld [vmem:[%s272 + $0x44] sm:$0xf]
        %v466 = vld [vmem:[%s272 + $0x48] sm:$0xf]
        %v467 = vld [vmem:[%s272 + $0x4c] sm:$0xf]
        %v468 = vld [vmem:[%s272 + $0x50] sm:$0xf]
        %v469 = vld [vmem:[%s272 + $0x54] sm:$0xf]
        %v470 = vld [vmem:[%s272 + $0x58] sm:$0xf]
        %v471 = vld [vmem:[%s272 + $0x5c] sm:$0xf]
        %v472 = vld [vmem:[%s272 + $0x60] sm:$0xf]
        %v473 = vld [vmem:[%s272 + $0x64] sm:$0xf]
        %v474 = vld [vmem:[%s272 + $0x68] sm:$0xf]
        %v475 = vld [vmem:[%s272 + $0x6c] sm:$0xf]
        %v476 = vld [vmem:[%s272 + $0x70] sm:$0xf]
        %v477 = vld [vmem:[%s272 + $0x74] sm:$0xf]
        %v478 = vld [vmem:[%s272 + $0x78] sm:$0xf]
        %v479 = vld [vmem:[%s272 + $0x7c] sm:$0xf]
        %v480 = vld [vmem:[%s305] sm:$0x1]
        %v482 = vlaneseq
        %v483 = vshrl.u32 %v482, 7
        %v484 = vsub.s32 0, %v483
        %v485 = vrot.slane %v480, %v484
        %v519 = vunpack.c.l.b16 %v448
        %v520 = vunpack.c.l.b16 %v449
        %v521 = vunpack.c.l.b16 %v450
        %v522 = vunpack.c.l.b16 %v451
        %v523 = vunpack.c.l.b16 %v452
        %v524 = vunpack.c.l.b16 %v453
        %v525 = vunpack.c.l.b16 %v454
        %v526 = vunpack.c.l.b16 %v455
        %v527 = vunpack.c.l.b16 %v456
        %v528 = vunpack.c.l.b16 %v457
        %v529 = vunpack.c.l.b16 %v458
        %v530 = vunpack.c.l.b16 %v459
        %v531 = vunpack.c.l.b16 %v460
        %v532 = vunpack.c.l.b16 %v461
        %v533 = vunpack.c.l.b16 %v462
        %v534 = vunpack.c.l.b16 %v463
        %v535 = vunpack.c.l.b16 %v464
        %v536 = vunpack.c.l.b16 %v465
        %v537 = vunpack.c.l.b16 %v466
        %v538 = vunpack.c.l.b16 %v467
        %v539 = vunpack.c.l.b16 %v468
        %v540 = vunpack.c.l.b16 %v469
        %v541 = vunpack.c.l.b16 %v470
        %v542 = vunpack.c.l.b16 %v471
        %v543 = vunpack.c.l.b16 %v472
        %v544 = vunpack.c.l.b16 %v473
        %v545 = vunpack.c.l.b16 %v474
        %v546 = vunpack.c.l.b16 %v475
        %v547 = vunpack.c.l.b16 %v476
        %v548 = vunpack.c.l.b16 %v477
        %v549 = vunpack.c.l.b16 %v478
        %v550 = vunpack.c.l.b16 %v479
        %v551 = vpack.c.b16 %v520, %v519
        %v552 = vpack.c.b16 %v522, %v521
        %v553 = vpack.c.b16 %v524, %v523
        %v554 = vpack.c.b16 %v526, %v525
        %v555 = vpack.c.b16 %v528, %v527
        %v556 = vpack.c.b16 %v530, %v529
        %v557 = vpack.c.b16 %v532, %v531
        %v558 = vpack.c.b16 %v534, %v533
        %v559 = vpack.c.b16 %v536, %v535
        %v560 = vpack.c.b16 %v538, %v537
        %v561 = vpack.c.b16 %v540, %v539
        %v562 = vpack.c.b16 %v542, %v541
        %v563 = vpack.c.b16 %v544, %v543
        %v564 = vpack.c.b16 %v546, %v545
        %v565 = vpack.c.b16 %v548, %v547
        %v566 = vpack.c.b16 %v550, %v549
        %583 = vmatprep.subr.bf16.mxu0 0
        %584 = vmatpush1.bf16.msra.mxu0 %v551
        %585 = vmatprep.subr.bf16.mxu0 0
        %586 = vmatpush1.bf16.msra.mxu0 %v552
        %587 = vmatprep.subr.bf16.mxu0 0
        %588 = vmatpush1.bf16.msra.mxu0 %v553
        %589 = vmatprep.subr.bf16.mxu0 0
        %590 = vmatpush1.bf16.msra.mxu0 %v554
        %591 = vmatprep.subr.bf16.mxu0 0
        %592 = vmatpush1.bf16.msra.mxu0 %v555
        %593 = vmatprep.subr.bf16.mxu0 0
        %594 = vmatpush1.bf16.msra.mxu0 %v556
        %595 = vmatprep.subr.bf16.mxu0 0
        %596 = vmatpush1.bf16.msra.mxu0 %v557
        %597 = vmatprep.subr.bf16.mxu0 0
        %598 = vmatpush1.bf16.msra.mxu0 %v558
        %599 = vmatprep.subr.bf16.mxu0 0
        %600 = vmatpush1.bf16.msra.mxu0 %v559
        %601 = vmatprep.subr.bf16.mxu0 0
        %602 = vmatpush1.bf16.msra.mxu0 %v560
        %603 = vmatprep.subr.bf16.mxu0 0
        %604 = vmatpush1.bf16.msra.mxu0 %v561
        %605 = vmatprep.subr.bf16.mxu0 0
        %606 = vmatpush1.bf16.msra.mxu0 %v562
        %607 = vmatprep.subr.bf16.mxu0 0
        %608 = vmatpush1.bf16.msra.mxu0 %v563
        %609 = vmatprep.subr.bf16.mxu0 0
        %610 = vmatpush1.bf16.msra.mxu0 %v564
        %611 = vmatprep.subr.bf16.mxu0 0
        %612 = vmatpush1.bf16.msra.mxu0 %v565
        %613 = vmatprep.subr.bf16.mxu0 0
        %614 = vmatpush1.bf16.msra.mxu0 %v566
        %615 = vmatprep.mubr.bf16.mxu0 %v447
        %616 = vmatmul.mubr.bf16.gmra.mrb[0].mxu0 %v446
        %v617 = vpop.f32.mrb[0].mxu0
        %v618 = vadd.f32 %v485, %v617
        %v619 = vpop.f32.mrb[0].mxu0
        %v620 = vpop.f32.mrb[0].mxu0
        %v621 = vadd.f32 %v485, %v620
        %v622 = vpop.f32.mrb[0].mxu0
        %623 = vdwg.mxu0
        %624 = vst [vmem:[%s301] sm:$0xff] %v618
        %625 = vst [vmem:[%s301 + $0x8] sm:$0xff] %v621
        %s626 = sand.u32 %s163, 1
        %s627 = scalar_lea.sflag [#allocation4], %s626
        %s628 = sand.u32 %s163, 1
        %s629 = smul.addr %s628, 16
        %s630 = scalar_lea.vmem [#allocation8], %s629
        // Predicated region
        $region53: #{tpu_custom_call.1} parent=39 // pred_check
          %p631 = pneg %p173
        $region54: #{tpu_custom_call.1} parent=39 // pred_check_branch
          %633 = sbr.rel (%p631) target = $region56
        $region55: #{tpu_custom_call.1} parent=39 // pred_region
          %s634 = smul.u32 2, %s25
          %s636 = ssub.s32 256, 256
          %637 = vsyncadd %s627, %s636
          %s638 = smul.addr %s634, 2
          %s639 = sadd.s32 %s26, %s638
          %s640 = smul.addr %s639, 128
          %s641 = scalar_lea.hbm %s5, %s640
          %s642 = sshll.u32 %s630, 4
          %s643 = int_to_ptr.vmem [resolvable:$true] %s642
          %648 = dma.vmem_to_hbm [thread:$0]  %s643, 256, %s641, %s627, 128, 256, 8
        $region56: #{tpu_custom_call.1} parent=39 // pred_fallthru
          _
      $region40: #{tpu_custom_call.1} parent=5 // pred_fallthru
        _
      %p649 = scmp.le.s32.totalorder 2, %s16
      // Predicated region
      $region57: #{tpu_custom_call.1} parent=5 // pred_check
        %p650 = pneg %p649
      $region58: #{tpu_custom_call.1} parent=5 // pred_check_branch
        %652 = sbr.rel (%p650) target = $region60
      $region59: #{tpu_custom_call.1} parent=5 // pred_region
        %s653 = ssub.s32 %s16, 2
        // Predicated region
        $region61: #{tpu_custom_call.1} parent=59 // pred_check
          %p654 = pneg %p179
        $region62: #{tpu_custom_call.1} parent=59 // pred_check_branch
          %656 = sbr.rel (%p654) target = $region64
        $region63: #{tpu_custom_call.1} parent=59 // pred_region
          %s657 = sand.u32 %s164, 1
          %s658 = scalar_lea.sflag [#allocation4], %s657
          %s659 = sand.u32 %s164, 1
          %s660 = smul.addr %s659, 16
          %s661 = scalar_lea.vmem [#allocation8], %s660
          %662 = dma.done %s658, 256
        $region64: #{tpu_custom_call.1} parent=59 // pred_fallthru
          _
      $region60: #{tpu_custom_call.1} parent=5 // pred_fallthru
        _
    $region6: #{tpu_custom_call.1} parent=1 // loop_footer
      %s20 = sadd.s32 1, %s16
    $region7: #{tpu_custom_call.1} parent=1 // loop_footer_branch
      %15 = sbr.rel target = $region3
    $region8: #{tpu_custom_call.1} parent=1 // loop_exit
      _
    %663 = vsyncpa [#allocation3], 1
    %s664 = scalar_lea.sflag [#allocation3], 1
    %665 = vsyncpa %s664, 1
    %666 = vsyncpa [#allocation6], 1
    %667 = vsyncpa [#allocation4], 1
    %s668 = scalar_lea.sflag [#allocation4], 1
    %669 = vsyncpa %s668, 1

</llo_original>
